<compile_context>
chip_gen: v5e
topology: v5e:2x2
jax: 0.10.0
libtpu: 0.0.40
codegen_flags: <defaults>
</compile_context>

<pallas_src>
import functools

import jax
import jax.numpy as jnp
from jax import lax
from jax.experimental import pallas as pl
from jax.experimental.pallas import tpu as pltpu

jax.config.update("jax_default_matmul_precision", "highest")
_HIGHEST = jax.lax.Precision.HIGHEST


def _bilstm_kernel(x_ref, mask_ref,
                   wih_f_ref, whh_f_ref, bias_f_ref,
                   wih_b_ref, whh_b_ref, bias_b_ref,
                   o_ref, *, seq_len, hidden_half):
    """x_ref: (S, TB, D) time-major; o_ref: (S, TB, 2*Hd); mask_ref: (S, TB, 1)."""
    S = seq_len
    Hd = hidden_half
    TB = x_ref.shape[1]

    def gates_to_hc(gates, c_prev):
        # PyTorch gate order: i, f, g, o
        i = jax.nn.sigmoid(gates[:, 0 * Hd:1 * Hd])
        f = jax.nn.sigmoid(gates[:, 1 * Hd:2 * Hd])
        g = jnp.tanh(gates[:, 2 * Hd:3 * Hd])
        o = jax.nn.sigmoid(gates[:, 3 * Hd:4 * Hd])
        c_new = f * c_prev + i * g
        h_new = o * jnp.tanh(c_new)
        return h_new, c_new

    def step(t, carry):
        h_f, c_f, h_b, c_b = carry
        tr = S - 1 - t

        # ---- forward direction, time t ----
        x_t = x_ref[t]                       # (TB, D)
        m_t = mask_ref[t]                    # (TB, 1), 1.0 = valid token
        g_f = (jnp.dot(x_t, wih_f_ref[...],
                       preferred_element_type=jnp.float32, precision=_HIGHEST)
               + jnp.dot(h_f, whh_f_ref[...],
                         preferred_element_type=jnp.float32, precision=_HIGHEST)
               + bias_f_ref[...])            # (TB, 4*Hd)
        h_fn, c_fn = gates_to_hc(g_f, c_f)
        h_f = m_t * h_fn + (1.0 - m_t) * h_f
        c_f = m_t * c_fn + (1.0 - m_t) * c_f
        o_ref[t, :, 0:Hd] = (m_t * h_f).astype(o_ref.dtype)

        # ---- backward direction, time S-1-t ----
        x_r = x_ref[tr]
        m_r = mask_ref[tr]
        g_b = (jnp.dot(x_r, wih_b_ref[...],
                       preferred_element_type=jnp.float32, precision=_HIGHEST)
               + jnp.dot(h_b, whh_b_ref[...],
                         preferred_element_type=jnp.float32, precision=_HIGHEST)
               + bias_b_ref[...])
        h_bn, c_bn = gates_to_hc(g_b, c_b)
        h_b = m_r * h_bn + (1.0 - m_r) * h_b
        c_b = m_r * c_bn + (1.0 - m_r) * c_b
        o_ref[tr, :, Hd:2 * Hd] = (m_r * h_b).astype(o_ref.dtype)

        return h_f, c_f, h_b, c_b

    z = jnp.zeros((TB, Hd), jnp.float32)
    lax.fori_loop(0, S, step, (z, z, z, z))


def _batch_tile(B, S, D, H):
    # Largest tile that respects the (8,128) sublane rule (TB == B or TB % 8 == 0),
    # keeps the x block around <= 8 MiB, and leaves grid >= 2 when possible (v7x: 2 TCs).
    bytes_per_row = S * max(D, H) * 4
    if B % 16 == 0 and (B // 2) % 8 == 0:
        tb = B // 2
        while tb % 2 == 0 and (tb // 2) % 8 == 0 and tb * bytes_per_row > (8 << 20):
            tb //= 2
        return tb
    return B


def lstm_encoding(inputs, params, mask=None, lens=None, return_cls=False):
    """Forward pass of `LSTMEncoding` (bidirectional, single layer, batch_first).

    inputs: (B, S, D); params: PyTorch-layout LSTM weights (see init_bilstm_params);
    mask: (B, S) bool (valid prefix) or None; lens: (B,) int or None.
    """
    B, S, D = inputs.shape
    hd = params["w_hh_f"].shape[1]
    H = 2 * hd
    out_dtype = inputs.dtype

    if lens is not None:
        maskf = (jnp.arange(S)[None, :] < lens[:, None]).astype(jnp.float32)
    elif mask is not None:
        maskf = mask.astype(jnp.float32)
    else:
        maskf = jnp.ones((B, S), jnp.float32)

    # Time-major, f32 inside the kernel (layout plumbing only).
    x_t = jnp.transpose(inputs.astype(jnp.float32), (1, 0, 2))     # (S, B, D)
    mask_t = jnp.transpose(maskf, (1, 0))[:, :, None]              # (S, B, 1)

    # Gate-packed, pre-transposed weights (lane dim = 4*hd) and fused biases.
    wih_f = jnp.transpose(params["w_ih_f"]).astype(jnp.float32)    # (D, 4hd)
    whh_f = jnp.transpose(params["w_hh_f"]).astype(jnp.float32)    # (hd, 4hd)
    b_f = (params["b_ih_f"] + params["b_hh_f"]).astype(jnp.float32)[None, :]
    wih_b = jnp.transpose(params["w_ih_b"]).astype(jnp.float32)
    whh_b = jnp.transpose(params["w_hh_b"]).astype(jnp.float32)
    b_b = (params["b_ih_b"] + params["b_hh_b"]).astype(jnp.float32)[None, :]

    TB = _batch_tile(B, S, D, H)
    assert B % TB == 0, "batch must be divisible by the batch tile"

    kernel = functools.partial(_bilstm_kernel, seq_len=S, hidden_half=hd)

    out_t = pl.pallas_call(
        kernel,
        out_shape=jax.ShapeDtypeStruct((S, B, H), jnp.float32),
        grid_spec=pltpu.PrefetchScalarGridSpec(
            num_scalar_prefetch=0,
            grid=(B // TB,),
            in_specs=[
                pl.BlockSpec((S, TB, D), lambda i: (0, i, 0)),     # x (time-major)
                pl.BlockSpec((S, TB, 1), lambda i: (0, i, 0)),     # valid mask
                pl.BlockSpec((D, 4 * hd), lambda i: (0, 0)),       # W_ih fwd^T
                pl.BlockSpec((hd, 4 * hd), lambda i: (0, 0)),      # W_hh fwd^T
                pl.BlockSpec((1, 4 * hd), lambda i: (0, 0)),       # bias fwd
                pl.BlockSpec((D, 4 * hd), lambda i: (0, 0)),       # W_ih bwd^T
                pl.BlockSpec((hd, 4 * hd), lambda i: (0, 0)),      # W_hh bwd^T
                pl.BlockSpec((1, 4 * hd), lambda i: (0, 0)),       # bias bwd
            ],
            out_specs=pl.BlockSpec((S, TB, H), lambda i: (0, i, 0)),
        ),
        compiler_params=pltpu.CompilerParams(
            dimension_semantics=("parallel",)),
    )(x_t, mask_t, wih_f, whh_f, b_f, wih_b, whh_b, b_b)

    outputs = jnp.transpose(out_t, (1, 0, 2)).astype(out_dtype)    # (B, S, H)

    if not return_cls:
        return outputs

    # hidden = cat([h[-2], h[-1]], -1): last valid forward state + backward state at t=0.
    last = jnp.maximum(jnp.sum(maskf, axis=1).astype(jnp.int32) - 1, 0)
    h_fwd = jnp.take_along_axis(outputs[..., :hd], last[:, None, None], axis=1)[:, 0, :]
    h_bwd = outputs[:, 0, hd:]
    hidden = jnp.concatenate([h_fwd, h_bwd], axis=-1).astype(out_dtype)
    return outputs, hidden


def init_bilstm_params(key, input_dim, hidden_dim):
    """Synthetic PyTorch-layout bi-LSTM parameters (gate order i, f, g, o)."""
    # TODO(synk): init_lstm() from the original repo is a custom initializer; a plain
    # uniform(-1/sqrt(Hd), 1/sqrt(Hd)) init is used here instead (forward math identical).
    assert hidden_dim % 2 == 0
    hd = hidden_dim // 2
    bound = 1.0 / (hd ** 0.5)
    ks = jax.random.split(key, 8)

    def u(k, shape):
        return jax.random.uniform(k, shape, jnp.float32, -bound, bound)

    return {
        "w_ih_f": u(ks[0], (4 * hd, input_dim)),
        "w_hh_f": u(ks[1], (4 * hd, hd)),
        "b_ih_f": u(ks[2], (4 * hd,)),
        "b_hh_f": u(ks[3], (4 * hd,)),
        "w_ih_b": u(ks[4], (4 * hd, input_dim)),
        "w_hh_b": u(ks[5], (4 * hd, hd)),
        "b_ih_b": u(ks[6], (4 * hd,)),
        "b_hh_b": u(ks[7], (4 * hd,)),
    }


def _lstm_reference(inputs, params, maskf):
    """Pure-JAX bidirectional LSTM matching PyTorch packed semantics (right-padded)."""
    x = inputs.astype(jnp.float32)
    B, S, _ = x.shape
    hd = params["w_hh_f"].shape[1]

    def run(d):
        w_ih = params[f"w_ih_{d}"]
        w_hh = params[f"w_hh_{d}"]
        b = params[f"b_ih_{d}"] + params[f"b_hh_{d}"]
        h = jnp.zeros((B, hd), jnp.float32)
        c = jnp.zeros((B, hd), jnp.float32)
        outs = [None] * S
        order = range(S) if d == "f" else range(S - 1, -1, -1)
        for t in order:
            g = (jnp.dot(x[:, t, :], w_ih.T, precision=_HIGHEST)
                 + jnp.dot(h, w_hh.T, precision=_HIGHEST) + b)
            i = jax.nn.sigmoid(g[:, 0:hd])
            f = jax.nn.sigmoid(g[:, hd:2 * hd])
            gg = jnp.tanh(g[:, 2 * hd:3 * hd])
            o = jax.nn.sigmoid(g[:, 3 * hd:4 * hd])
            c_new = f * c + i * gg
            h_new = o * jnp.tanh(c_new)
            m = maskf[:, t][:, None]
            c = m * c_new + (1.0 - m) * c
            h = m * h_new + (1.0 - m) * h
            outs[t] = m * h
        return jnp.stack(outs, axis=1)

    return jnp.concatenate([run("f"), run("b")], axis=-1)


if __name__ == "__main__":
    key = jax.random.PRNGKey(0)
    k_x, k_p = jax.random.split(key, 2)

    B, S = 2, 8
    input_dim, hidden_dim = 32, 32          # config.hidden_dim = 32 -> 16 per direction
    inputs = jax.random.normal(k_x, (B, S, input_dim), dtype=jnp.float32)
    params = init_bilstm_params(k_p, input_dim, hidden_dim)

    # Ragged lengths (valid-prefix mask) exercising the pack_padded_sequence path.
    lens = jnp.array([S, 5], dtype=jnp.int32)
    mask = jnp.arange(S)[None, :] < lens[:, None]

    out_masked, hidden = lstm_encoding(inputs, params, mask=mask, return_cls=True)
    out_masked = jax.block_until_ready(out_masked)
    ref_masked = _lstm_reference(inputs, params, mask.astype(jnp.float32))
    assert out_masked.shape == (B, S, hidden_dim)
    assert hidden.shape == (B, hidden_dim)
    assert jnp.allclose(out_masked, ref_masked, atol=5e-4, rtol=1e-3), "masked path mismatch"

    # Full-length path (mask=None), the module's default call.
    out_full = lstm_encoding(inputs, params)
    out_full = jax.block_until_ready(out_full)
    ref_full = _lstm_reference(inputs, params, jnp.ones((B, S), jnp.float32))
    assert jnp.allclose(out_full, ref_full, atol=5e-4, rtol=1e-3), "full-length path mismatch"

    print("KERNEL_OK")
</pallas_src>

<mosaic_0001>
module attributes {stable_mosaic.version = 11 : i64} {
  func.func @_bilstm_kernel(%arg0: i32, %arg1: memref<8x2x32xf32, #tpu.memory_space<vmem>>, %arg2: memref<8x2x1xf32, #tpu.memory_space<vmem>>, %arg3: memref<32x64xf32, #tpu.memory_space<vmem>>, %arg4: memref<16x64xf32, #tpu.memory_space<vmem>>, %arg5: memref<1x64xf32, #tpu.memory_space<vmem>>, %arg6: memref<32x64xf32, #tpu.memory_space<vmem>>, %arg7: memref<16x64xf32, #tpu.memory_space<vmem>>, %arg8: memref<1x64xf32, #tpu.memory_space<vmem>>, %arg9: memref<8x2x32xf32, #tpu.memory_space<vmem>>) attributes {dimension_semantics = [#tpu.dimension_semantics<parallel>], iteration_bounds = array<i64: 1>, scalar_prefetch = 0 : i64, scratch_operands = 0 : i64, tpu.core_type = #tpu.core_type<tc>, window_params = [{transform_indices = @transform_0, window_bounds = array<i64: 8, 2, 32>}, {transform_indices = @transform_1, window_bounds = array<i64: 8, 2, 1>}, {pipeline_mode = #tpu.pipeline_mode<synchronous>, transform_indices = @transform_2, window_bounds = array<i64: 32, 64>}, {pipeline_mode = #tpu.pipeline_mode<synchronous>, transform_indices = @transform_3, window_bounds = array<i64: 16, 64>}, {pipeline_mode = #tpu.pipeline_mode<synchronous>, transform_indices = @transform_4, window_bounds = array<i64: 1, 64>}, {pipeline_mode = #tpu.pipeline_mode<synchronous>, transform_indices = @transform_5, window_bounds = array<i64: 32, 64>}, {pipeline_mode = #tpu.pipeline_mode<synchronous>, transform_indices = @transform_6, window_bounds = array<i64: 16, 64>}, {pipeline_mode = #tpu.pipeline_mode<synchronous>, transform_indices = @transform_7, window_bounds = array<i64: 1, 64>}, {transform_indices = @transform_8, window_bounds = array<i64: 8, 2, 32>}]} {
    %cst = arith.constant 0.000000e+00 : f32
    %0 = vector.broadcast %cst : f32 to vector<2x16xf32>
    %c0_i32 = arith.constant 0 : i32
    %c8_i32 = arith.constant 8 : i32
    %1 = arith.addi %c0_i32, %c8_i32 : i32
    %c1_i32 = arith.constant 1 : i32
    %2:4 = scf.for %arg10 = %c0_i32 to %1 step %c1_i32 iter_args(%arg11 = %0, %arg12 = %0, %arg13 = %0, %arg14 = %0) -> (vector<2x16xf32>, vector<2x16xf32>, vector<2x16xf32>, vector<2x16xf32>)  : i32 {
      %c7_i32 = arith.constant 7 : i32
      %3 = arith.subi %c7_i32, %arg10 : i32
      %4 = arith.index_cast %arg10 : i32 to index
      %c0 = arith.constant 0 : index
      %c0_1 = arith.constant 0 : index
      %5 = vector.load %arg1[%4, %c0, %c0_1] : memref<8x2x32xf32, #tpu.memory_space<vmem>>, vector<1x2x32xf32>
      %6 = vector.shape_cast %5 : vector<1x2x32xf32> to vector<2x32xf32>
      %7 = arith.index_cast %arg10 : i32 to index
      %c0_2 = arith.constant 0 : index
      %c0_3 = arith.constant 0 : index
      %8 = vector.load %arg2[%7, %c0_2, %c0_3] : memref<8x2x1xf32, #tpu.memory_space<vmem>>, vector<1x2x1xf32>
      %9 = vector.shape_cast %8 : vector<1x2x1xf32> to vector<2x1xf32>
      %c0_4 = arith.constant 0 : index
      %c0_5 = arith.constant 0 : index
      %10 = vector.load %arg3[%c0_4, %c0_5] : memref<32x64xf32, #tpu.memory_space<vmem>>, vector<32x64xf32>
      %cst_6 = arith.constant dense<0.000000e+00> : vector<2x64xf32>
      %11 = tpu.matmul %6, %10, %cst_6 {dimension_numbers = #tpu.dot_dimension_numbers<[1], [0], [0], [1], [0, 0, 1, 1], [], []>, precision = #tpu.contract_precision<fp32>} : vector<2x32xf32>, vector<32x64xf32>, vector<2x64xf32> -> vector<2x64xf32>
      %c0_7 = arith.constant 0 : index
      %c0_8 = arith.constant 0 : index
      %12 = vector.load %arg4[%c0_7, %c0_8] : memref<16x64xf32, #tpu.memory_space<vmem>>, vector<16x64xf32>
      %cst_9 = arith.constant dense<0.000000e+00> : vector<2x64xf32>
      %13 = tpu.matmul %arg11, %12, %cst_9 {dimension_numbers = #tpu.dot_dimension_numbers<[1], [0], [0], [1], [0, 0, 1, 1], [], []>, precision = #tpu.contract_precision<fp32>} : vector<2x16xf32>, vector<16x64xf32>, vector<2x64xf32> -> vector<2x64xf32>
      %14 = arith.addf %11, %13 : vector<2x64xf32>
      %c0_10 = arith.constant 0 : index
      %c0_11 = arith.constant 0 : index
      %15 = vector.load %arg5[%c0_10, %c0_11] : memref<1x64xf32, #tpu.memory_space<vmem>>, vector<1x64xf32>
      %16 = vector.broadcast %15 : vector<1x64xf32> to vector<2x64xf32>
      %17 = arith.addf %14, %16 : vector<2x64xf32>
      %18 = vector.extract_strided_slice %17 {offsets = [0, 0], sizes = [2, 16], strides = [1, 1]} : vector<2x64xf32> to vector<2x16xf32>
      %19 = arith.negf %18 : vector<2x16xf32>
      %20 = math.exp %19 : vector<2x16xf32>
      %cst_12 = arith.constant 1.000000e+00 : f32
      %21 = vector.broadcast %cst_12 : f32 to vector<2x16xf32>
      %22 = arith.addf %21, %20 : vector<2x16xf32>
      %23 = arith.divf %21, %22 : vector<2x16xf32>
      %24 = vector.extract_strided_slice %17 {offsets = [0, 16], sizes = [2, 16], strides = [1, 1]} : vector<2x64xf32> to vector<2x16xf32>
      %25 = arith.negf %24 : vector<2x16xf32>
      %26 = math.exp %25 : vector<2x16xf32>
      %cst_13 = arith.constant 1.000000e+00 : f32
      %27 = vector.broadcast %cst_13 : f32 to vector<2x16xf32>
      %28 = arith.addf %27, %26 : vector<2x16xf32>
      %29 = arith.divf %27, %28 : vector<2x16xf32>
      %30 = vector.extract_strided_slice %17 {offsets = [0, 32], sizes = [2, 16], strides = [1, 1]} : vector<2x64xf32> to vector<2x16xf32>
      %31 = math.tanh %30 : vector<2x16xf32>
      %32 = vector.extract_strided_slice %17 {offsets = [0, 48], sizes = [2, 16], strides = [1, 1]} : vector<2x64xf32> to vector<2x16xf32>
      %33 = arith.negf %32 : vector<2x16xf32>
      %34 = math.exp %33 : vector<2x16xf32>
      %cst_14 = arith.constant 1.000000e+00 : f32
      %35 = vector.broadcast %cst_14 : f32 to vector<2x16xf32>
      %36 = arith.addf %35, %34 : vector<2x16xf32>
      %37 = arith.divf %35, %36 : vector<2x16xf32>
      %38 = arith.mulf %29, %arg12 : vector<2x16xf32>
      %39 = arith.mulf %23, %31 : vector<2x16xf32>
      %40 = arith.addf %38, %39 : vector<2x16xf32>
      %41 = math.tanh %40 : vector<2x16xf32>
      %42 = arith.mulf %37, %41 : vector<2x16xf32>
      %43 = vector.broadcast %9 : vector<2x1xf32> to vector<2x16xf32>
      %44 = arith.mulf %43, %42 : vector<2x16xf32>
      %cst_15 = arith.constant 1.000000e+00 : f32
      %45 = vector.broadcast %cst_15 : f32 to vector<2x1xf32>
      %46 = arith.subf %45, %9 : vector<2x1xf32>
      %47 = vector.broadcast %46 : vector<2x1xf32> to vector<2x16xf32>
      %48 = arith.mulf %47, %arg11 : vector<2x16xf32>
      %49 = arith.addf %44, %48 : vector<2x16xf32>
      %50 = vector.broadcast %9 : vector<2x1xf32> to vector<2x16xf32>
      %51 = arith.mulf %50, %40 : vector<2x16xf32>
      %cst_16 = arith.constant 1.000000e+00 : f32
      %52 = vector.broadcast %cst_16 : f32 to vector<2x1xf32>
      %53 = arith.subf %52, %9 : vector<2x1xf32>
      %54 = vector.broadcast %53 : vector<2x1xf32> to vector<2x16xf32>
      %55 = arith.mulf %54, %arg12 : vector<2x16xf32>
      %56 = arith.addf %51, %55 : vector<2x16xf32>
      %57 = vector.broadcast %9 : vector<2x1xf32> to vector<2x16xf32>
      %58 = arith.mulf %57, %49 : vector<2x16xf32>
      %59 = arith.index_cast %arg10 : i32 to index
      %c0_17 = arith.constant 0 : index
      %c0_18 = arith.constant 0 : index
      %60 = vector.load %arg9[%59, %c0_17, %c0_18] : memref<8x2x32xf32, #tpu.memory_space<vmem>>, vector<1x2x16xf32>
      %61 = vector.shape_cast %60 : vector<1x2x16xf32> to vector<2x16xf32>
      %62 = vector.shape_cast %58 : vector<2x16xf32> to vector<1x2x16xf32>
      tpu.vector_store %arg9[%59, %c0_17, %c0_18], %62 {strides = array<i32>} : memref<8x2x32xf32, #tpu.memory_space<vmem>>, vector<1x2x16xf32>,
      %63 = arith.index_cast %3 : i32 to index
      %c0_19 = arith.constant 0 : index
      %c0_20 = arith.constant 0 : index
      %64 = vector.load %arg1[%63, %c0_19, %c0_20] : memref<8x2x32xf32, #tpu.memory_space<vmem>>, vector<1x2x32xf32>
      %65 = vector.shape_cast %64 : vector<1x2x32xf32> to vector<2x32xf32>
      %66 = arith.index_cast %3 : i32 to index
      %c0_21 = arith.constant 0 : index
      %c0_22 = arith.constant 0 : index
      %67 = vector.load %arg2[%66, %c0_21, %c0_22] : memref<8x2x1xf32, #tpu.memory_space<vmem>>, vector<1x2x1xf32>
      %68 = vector.shape_cast %67 : vector<1x2x1xf32> to vector<2x1xf32>
      %c0_23 = arith.constant 0 : index
      %c0_24 = arith.constant 0 : index
      %69 = vector.load %arg6[%c0_23, %c0_24] : memref<32x64xf32, #tpu.memory_space<vmem>>, vector<32x64xf32>
      %cst_25 = arith.constant dense<0.000000e+00> : vector<2x64xf32>
      %70 = tpu.matmul %65, %69, %cst_25 {dimension_numbers = #tpu.dot_dimension_numbers<[1], [0], [0], [1], [0, 0, 1, 1], [], []>, precision = #tpu.contract_precision<fp32>} : vector<2x32xf32>, vector<32x64xf32>, vector<2x64xf32> -> vector<2x64xf32>
      %c0_26 = arith.constant 0 : index
      %c0_27 = arith.constant 0 : index
      %71 = vector.load %arg7[%c0_26, %c0_27] : memref<16x64xf32, #tpu.memory_space<vmem>>, vector<16x64xf32>
      %cst_28 = arith.constant dense<0.000000e+00> : vector<2x64xf32>
      %72 = tpu.matmul %arg13, %71, %cst_28 {dimension_numbers = #tpu.dot_dimension_numbers<[1], [0], [0], [1], [0, 0, 1, 1], [], []>, precision = #tpu.contract_precision<fp32>} : vector<2x16xf32>, vector<16x64xf32>, vector<2x64xf32> -> vector<2x64xf32>
      %73 = arith.addf %70, %72 : vector<2x64xf32>
      %c0_29 = arith.constant 0 : index
      %c0_30 = arith.constant 0 : index
      %74 = vector.load %arg8[%c0_29, %c0_30] : memref<1x64xf32, #tpu.memory_space<vmem>>, vector<1x64xf32>
      %75 = vector.broadcast %74 : vector<1x64xf32> to vector<2x64xf32>
      %76 = arith.addf %73, %75 : vector<2x64xf32>
      %77 = vector.extract_strided_slice %76 {offsets = [0, 0], sizes = [2, 16], strides = [1, 1]} : vector<2x64xf32> to vector<2x16xf32>
      %78 = arith.negf %77 : vector<2x16xf32>
      %79 = math.exp %78 : vector<2x16xf32>
      %cst_31 = arith.constant 1.000000e+00 : f32
      %80 = vector.broadcast %cst_31 : f32 to vector<2x16xf32>
      %81 = arith.addf %80, %79 : vector<2x16xf32>
      %82 = arith.divf %80, %81 : vector<2x16xf32>
      %83 = vector.extract_strided_slice %76 {offsets = [0, 16], sizes = [2, 16], strides = [1, 1]} : vector<2x64xf32> to vector<2x16xf32>
      %84 = arith.negf %83 : vector<2x16xf32>
      %85 = math.exp %84 : vector<2x16xf32>
      %cst_32 = arith.constant 1.000000e+00 : f32
      %86 = vector.broadcast %cst_32 : f32 to vector<2x16xf32>
      %87 = arith.addf %86, %85 : vector<2x16xf32>
      %88 = arith.divf %86, %87 : vector<2x16xf32>
      %89 = vector.extract_strided_slice %76 {offsets = [0, 32], sizes = [2, 16], strides = [1, 1]} : vector<2x64xf32> to vector<2x16xf32>
      %90 = math.tanh %89 : vector<2x16xf32>
      %91 = vector.extract_strided_slice %76 {offsets = [0, 48], sizes = [2, 16], strides = [1, 1]} : vector<2x64xf32> to vector<2x16xf32>
      %92 = arith.negf %91 : vector<2x16xf32>
      %93 = math.exp %92 : vector<2x16xf32>
      %cst_33 = arith.constant 1.000000e+00 : f32
      %94 = vector.broadcast %cst_33 : f32 to vector<2x16xf32>
      %95 = arith.addf %94, %93 : vector<2x16xf32>
      %96 = arith.divf %94, %95 : vector<2x16xf32>
      %97 = arith.mulf %88, %arg14 : vector<2x16xf32>
      %98 = arith.mulf %82, %90 : vector<2x16xf32>
      %99 = arith.addf %97, %98 : vector<2x16xf32>
      %100 = math.tanh %99 : vector<2x16xf32>
      %101 = arith.mulf %96, %100 : vector<2x16xf32>
      %102 = vector.broadcast %68 : vector<2x1xf32> to vector<2x16xf32>
      %103 = arith.mulf %102, %101 : vector<2x16xf32>
      %cst_34 = arith.constant 1.000000e+00 : f32
      %104 = vector.broadcast %cst_34 : f32 to vector<2x1xf32>
      %105 = arith.subf %104, %68 : vector<2x1xf32>
      %106 = vector.broadcast %105 : vector<2x1xf32> to vector<2x16xf32>
      %107 = arith.mulf %106, %arg13 : vector<2x16xf32>
      %108 = arith.addf %103, %107 : vector<2x16xf32>
      %109 = vector.broadcast %68 : vector<2x1xf32> to vector<2x16xf32>
      %110 = arith.mulf %109, %99 : vector<2x16xf32>
      %cst_35 = arith.constant 1.000000e+00 : f32
      %111 = vector.broadcast %cst_35 : f32 to vector<2x1xf32>
      %112 = arith.subf %111, %68 : vector<2x1xf32>
      %113 = vector.broadcast %112 : vector<2x1xf32> to vector<2x16xf32>
      %114 = arith.mulf %113, %arg14 : vector<2x16xf32>
      %115 = arith.addf %110, %114 : vector<2x16xf32>
      %116 = vector.broadcast %68 : vector<2x1xf32> to vector<2x16xf32>
      %117 = arith.mulf %116, %108 : vector<2x16xf32>
      %118 = arith.index_cast %3 : i32 to index
      %c0_36 = arith.constant 0 : index
      %c16 = arith.constant 16 : index
      %119 = vector.load %arg9[%118, %c0_36, %c16] : memref<8x2x32xf32, #tpu.memory_space<vmem>>, vector<1x2x16xf32>
      %120 = vector.shape_cast %119 : vector<1x2x16xf32> to vector<2x16xf32>
      %121 = vector.shape_cast %117 : vector<2x16xf32> to vector<1x2x16xf32>
      tpu.vector_store %arg9[%118, %c0_36, %c16], %121 {strides = array<i32>} : memref<8x2x32xf32, #tpu.memory_space<vmem>>, vector<1x2x16xf32>,
      scf.yield %49, %56, %108, %115 : vector<2x16xf32>, vector<2x16xf32>, vector<2x16xf32>, vector<2x16xf32>
    }
    %c8_i32_0 = arith.constant 8 : i32
    return
  }
  func.func @transform_0(%arg0: i32) -> (i32, i32, i32) {
    %c0_i32 = arith.constant 0 : i32
    %c0_i32_0 = arith.constant 0 : i32
    %c0_i32_1 = arith.constant 0 : i32
    return %c0_i32, %arg0, %c0_i32_0 : i32, i32, i32
  }
  func.func @transform_1(%arg0: i32) -> (i32, i32, i32) {
    %c0_i32 = arith.constant 0 : i32
    %c0_i32_0 = arith.constant 0 : i32
    %c0_i32_1 = arith.constant 0 : i32
    return %c0_i32, %arg0, %c0_i32_0 : i32, i32, i32
  }
  func.func @transform_2(%arg0: i32) -> (i32, i32) {
    %c0_i32 = arith.constant 0 : i32
    %c0_i32_0 = arith.constant 0 : i32
    %c0_i32_1 = arith.constant 0 : i32
    return %c0_i32, %c0_i32_0 : i32, i32
  }
  func.func @transform_3(%arg0: i32) -> (i32, i32) {
    %c0_i32 = arith.constant 0 : i32
    %c0_i32_0 = arith.constant 0 : i32
    %c0_i32_1 = arith.constant 0 : i32
    return %c0_i32, %c0_i32_0 : i32, i32
  }
  func.func @transform_4(%arg0: i32) -> (i32, i32) {
    %c0_i32 = arith.constant 0 : i32
    %c0_i32_0 = arith.constant 0 : i32
    %c0_i32_1 = arith.constant 0 : i32
    return %c0_i32, %c0_i32_0 : i32, i32
  }
  func.func @transform_5(%arg0: i32) -> (i32, i32) {
    %c0_i32 = arith.constant 0 : i32
    %c0_i32_0 = arith.constant 0 : i32
    %c0_i32_1 = arith.constant 0 : i32
    return %c0_i32, %c0_i32_0 : i32, i32
  }
  func.func @transform_6(%arg0: i32) -> (i32, i32) {
    %c0_i32 = arith.constant 0 : i32
    %c0_i32_0 = arith.constant 0 : i32
    %c0_i32_1 = arith.constant 0 : i32
    return %c0_i32, %c0_i32_0 : i32, i32
  }
  func.func @transform_7(%arg0: i32) -> (i32, i32) {
    %c0_i32 = arith.constant 0 : i32
    %c0_i32_0 = arith.constant 0 : i32
    %c0_i32_1 = arith.constant 0 : i32
    return %c0_i32, %c0_i32_0 : i32, i32
  }
  func.func @transform_8(%arg0: i32) -> (i32, i32, i32) {
    %c0_i32 = arith.constant 0 : i32
    %c0_i32_0 = arith.constant 0 : i32
    %c0_i32_1 = arith.constant 0 : i32
    return %c0_i32, %arg0, %c0_i32_0 : i32, i32, i32
  }
}

</mosaic_0001>

<llo_original>
// kernel: tpu_custom_call.1
$region0: #{tpu_custom_call.1}
  #allocation0 [shape = 'u32[]', space=smem, size = 0x4, offset = 0x4, fixed_abs, tag = 'smem constant byte address 0x4 - core index']
  #allocation1 [shape = 'u32[72,128]{1,0:T(1,128)}', space=vmem, size = 0x9000, scoped, tag = 'internal scratch']
  %s0 = inlined_call_operand.vmem [shape: f32[8,2,32], index: 0, kind: input, shape index: {}]
  %s1 = inlined_call_operand.vmem [shape: f32[8,2,1], index: 1, kind: input, shape index: {}]
  %s2 = inlined_call_operand.hbm [shape: f32[32,64], index: 2, kind: input, shape index: {}]
  %s3 = inlined_call_operand.hbm [shape: f32[16,64], index: 3, kind: input, shape index: {}]
  %s4 = inlined_call_operand.vmem [shape: f32[1,64], index: 4, kind: input, shape index: {}]
  %s5 = inlined_call_operand.hbm [shape: f32[32,64], index: 5, kind: input, shape index: {}]
  %s6 = inlined_call_operand.hbm [shape: f32[16,64], index: 6, kind: input, shape index: {}]
  %s7 = inlined_call_operand.vmem [shape: f32[1,64], index: 7, kind: input, shape index: {}]
  %s8 = inlined_call_operand.hbm [shape: f32[8,2,32], index: 8, kind: output, shape index: {}]
  %s9 = sld [smem:[#allocation0]]
  $region65: #{tpu_custom_call.1} parent=0
    _
  %s11 = ssub.s32 1, %s9
  %s12 = scalar_select 0, %s11, %s9
  $region1: #{tpu_custom_call.1} parent=0
    #allocation2 [shape = 'u8[16384]{0}', space=vmem, size = 0x4000, scoped, tag = 'input window, operand 2, single buffered']
    #allocation3 [shape = 's32[1]{0}', space=sflag, size = 0x4, scoped, tag = 'scoped memory for tpu_custom_call.1']
    #allocation4 [shape = 's32[1]{0}', space=sflag, size = 0x4, scoped, tag = 'scoped memory for tpu_custom_call.1']
    #allocation5 [shape = 'u8[8192]{0}', space=vmem, size = 0x2000, scoped, tag = 'input window, operand 3, single buffered']
    #allocation6 [shape = 's32[1]{0}', space=sflag, size = 0x4, scoped, tag = 'scoped memory for tpu_custom_call.1']
    #allocation7 [shape = 'u8[16384]{0}', space=vmem, size = 0x4000, scoped, tag = 'input window, operand 5, single buffered']
    #allocation8 [shape = 'u8[8192]{0}', space=vmem, size = 0x2000, scoped, tag = 'input window, operand 6, single buffered']
    #allocation9 [shape = 's32[1]{0}', space=sflag, size = 0x4, scoped, tag = 'scoped memory for tpu_custom_call.1']
    #allocation10 [shape = 'u8[8192]{0}', space=vmem, size = 0x2000, scoped, tag = 'output window, operand 0, single buffered']
    %13 = vsyncpa [#allocation3], 0
    %14 = vsyncpa [#allocation6], 0
    %15 = vsyncpa [#allocation9], 0
    %16 = vsyncpa [#allocation4], 0
    // Predicated region
    $region2: #{tpu_custom_call.1} parent=1 // pred_check
      _
    $region3: #{tpu_custom_call.1} parent=1 // pred_check_branch
      %18 = sbr.rel (0) target = $region5
    $region4: #{tpu_custom_call.1} parent=1 // pred_region
      _
    $region5: #{tpu_custom_call.1} parent=1 // pred_fallthru
      _
    // Predicated region
    $region6: #{tpu_custom_call.1} parent=1 // pred_check
      _
    $region7: #{tpu_custom_call.1} parent=1 // pred_check_branch
      %20 = sbr.rel (0) target = $region9
    $region8: #{tpu_custom_call.1} parent=1 // pred_region
      _
    $region9: #{tpu_custom_call.1} parent=1 // pred_fallthru
      _
    // Predicated region
    $region10: #{tpu_custom_call.1} parent=1 // pred_check
      _
    $region11: #{tpu_custom_call.1} parent=1 // pred_check_branch
      %22 = sbr.rel (0) target = $region13
    $region12: #{tpu_custom_call.1} parent=1 // pred_region
      %24 = vsyncadd [#allocation3], 0
      %s25 = sshll.u32 %s2, 4
      %s26 = int_to_ptr.hbm [resolvable:$true] %s25
      %s27 = sshll.u32 [#allocation2], 4
      %s28 = int_to_ptr.vmem [resolvable:$true] %s27
      %33 = dma.hbm_to_vmem [thread:$0]  %s26, 512, %s28, [#allocation3], 128, 128, 8
    $region13: #{tpu_custom_call.1} parent=1 // pred_fallthru
      _
    // Predicated region
    $region14: #{tpu_custom_call.1} parent=1 // pred_check
      _
    $region15: #{tpu_custom_call.1} parent=1 // pred_check_branch
      %35 = sbr.rel (0) target = $region17
    $region16: #{tpu_custom_call.1} parent=1 // pred_region
      %37 = vsyncadd [#allocation6], 0
      %s38 = sshll.u32 %s3, 4
      %s39 = int_to_ptr.hbm [resolvable:$true] %s38
      %s40 = sshll.u32 [#allocation5], 4
      %s41 = int_to_ptr.vmem [resolvable:$true] %s40
      %46 = dma.hbm_to_vmem [thread:$0]  %s39, 256, %s41, [#allocation6], 128, 128, 8
    $region17: #{tpu_custom_call.1} parent=1 // pred_fallthru
      _
    // Predicated region
    $region18: #{tpu_custom_call.1} parent=1 // pred_check
      _
    $region19: #{tpu_custom_call.1} parent=1 // pred_check_branch
      %48 = sbr.rel (0) target = $region21
    $region20: #{tpu_custom_call.1} parent=1 // pred_region
      _
    $region21: #{tpu_custom_call.1} parent=1 // pred_fallthru
      _
    // Predicated region
    $region22: #{tpu_custom_call.1} parent=1 // pred_check
      _
    $region23: #{tpu_custom_call.1} parent=1 // pred_check_branch
      %50 = sbr.rel (0) target = $region25
    $region24: #{tpu_custom_call.1} parent=1 // pred_region
      %52 = vsyncadd [#allocation6], 0
      %s53 = sshll.u32 %s5, 4
      %s54 = int_to_ptr.hbm [resolvable:$true] %s53
      %s55 = sshll.u32 [#allocation7], 4
      %s56 = int_to_ptr.vmem [resolvable:$true] %s55
      %61 = dma.hbm_to_vmem [thread:$0]  %s54, 512, %s56, [#allocation6], 128, 128, 8
    $region25: #{tpu_custom_call.1} parent=1 // pred_fallthru
      _
    // Predicated region
    $region26: #{tpu_custom_call.1} parent=1 // pred_check
      _
    $region27: #{tpu_custom_call.1} parent=1 // pred_check_branch
      %63 = sbr.rel (0) target = $region29
    $region28: #{tpu_custom_call.1} parent=1 // pred_region
      %65 = vsyncadd [#allocation9], 0
      %s66 = sshll.u32 %s6, 4
      %s67 = int_to_ptr.hbm [resolvable:$true] %s66
      %s68 = sshll.u32 [#allocation8], 4
      %s69 = int_to_ptr.vmem [resolvable:$true] %s68
      %74 = dma.hbm_to_vmem [thread:$0]  %s67, 256, %s69, [#allocation9], 128, 128, 8
    $region29: #{tpu_custom_call.1} parent=1 // pred_fallthru
      _
    // Predicated region
    $region30: #{tpu_custom_call.1} parent=1 // pred_check
      _
    $region31: #{tpu_custom_call.1} parent=1 // pred_check_branch
      %76 = sbr.rel (0) target = $region33
    $region32: #{tpu_custom_call.1} parent=1 // pred_region
      _
    $region33: #{tpu_custom_call.1} parent=1 // pred_fallthru
      _
    // Predicated region
    $region34: #{tpu_custom_call.1} parent=1 // pred_check
      _
    $region35: #{tpu_custom_call.1} parent=1 // pred_check_branch
      %78 = sbr.rel (0) target = $region37
    $region36: #{tpu_custom_call.1} parent=1 // pred_region
      %80 = dma.done [#allocation3], 512
    $region37: #{tpu_custom_call.1} parent=1 // pred_fallthru
      _
    // Predicated region
    $region38: #{tpu_custom_call.1} parent=1 // pred_check
      _
    $region39: #{tpu_custom_call.1} parent=1 // pred_check_branch
      %82 = sbr.rel (0) target = $region41
    $region40: #{tpu_custom_call.1} parent=1 // pred_region
      %84 = dma.done [#allocation6], 256
    $region41: #{tpu_custom_call.1} parent=1 // pred_fallthru
      _
    // Predicated region
    $region42: #{tpu_custom_call.1} parent=1 // pred_check
      _
    $region43: #{tpu_custom_call.1} parent=1 // pred_check_branch
      %86 = sbr.rel (0) target = $region45
    $region44: #{tpu_custom_call.1} parent=1 // pred_region
      %88 = dma.done [#allocation6], 512
    $region45: #{tpu_custom_call.1} parent=1 // pred_fallthru
      _
    // Predicated region
    $region46: #{tpu_custom_call.1} parent=1 // pred_check
      _
    $region47: #{tpu_custom_call.1} parent=1 // pred_check_branch
      %90 = sbr.rel (0) target = $region49
    $region48: #{tpu_custom_call.1} parent=1 // pred_region
      %92 = dma.done [#allocation9], 256
    $region49: #{tpu_custom_call.1} parent=1 // pred_fallthru
      _
    loop: start=0, step=1, limit=8
    $region50: #{tpu_custom_call.1} parent=1 // loop_pre_header
      _
    $region51: #{tpu_custom_call.1} parent=1 // loop_header
      %s94 = sphi 0, %s98
      %p95 = scmp.ge.s32.totalorder %s94, 8
      %v99 = vphi 0.0, %v524
      %v100 = vphi 0.0, %v527
      %v101 = vphi 0.0, %v954
      %v102 = vphi 0.0, %v957
    $region52: #{tpu_custom_call.1} parent=1 // loop_header_branch
      %97 = sbr.rel (%p95) target = $region56
    $region53: #{tpu_custom_call.1} parent=1 // loop_body
      %s103 = ssub.s32 7, %s94
      %s104 = smul.u32 %s94, 2
      %s105 = scalar_lea.vmem %s0, %s104
      %v106 = vld [vmem:[%s105] sm:$0x3]
      %s107 = scalar_lea.vmem %s1, %s104
      %v108 = vld [vmem:[%s107] sm:$0x3]
      %v109 = vld [vmem:[#allocation2] sm:$0xff]
      %v110 = vld [vmem:[#allocation2 + $0x8] sm:$0xff]
      %v111 = vld [vmem:[#allocation2 + $0x10] sm:$0xff]
      %v112 = vld [vmem:[#allocation2 + $0x18] sm:$0xff]
      %v113 = vld [vmem:[#allocation5] sm:$0xff]
      %v114 = vld [vmem:[#allocation5 + $0x8] sm:$0xff]
      %116 = vrot.lane.b32.xlu0 %v99, 80
      %v117 = vpop.permute.xlu0 %116
      %vm118 = vcmask 130048
      %v119 = vsel %vm118, %v117, 0
      %121 = vmatpush.msra.mxu0 0.0
      %122 = vmatpush.msra.mxu0 0.0
      %123 = vmatpush.msra.mxu0 0.0
      %124 = vmatpush.msra.mxu0 0.0
      %125 = vmatpush.msra.mxu0 0.0
      %126 = vmatpush.msra.mxu0 0.0
      %127 = vmatpush.msra.mxu0 0.0
      %128 = vmatpush.msra.mxu0 0.0
      %129 = vmatpush.msra.mxu0 0.0
      %130 = vmatpush.msra.mxu0 0.0
      %131 = vmatpush.msra.mxu0 0.0
      %132 = vmatpush.msra.mxu0 0.0
      %133 = vmatpush.msra.mxu0 0.0
      %134 = vmatpush.msra.mxu0 0.0
      %v135 = vand.u32 %v114, 4294901760
      %136 = vmatpush.msra.mxu0 %v135
      %v137 = vand.u32 %v113, 4294901760
      %138 = vmatpush.msra.mxu0 %v137
      %v139 = vand.u32 %v119, 4294901760
      %v140 = vsub.f32 %v119, %v139
      %v141 = vand.u32 %v140, 4294901760
      %v142 = vsub.f32 %v140, %v141
      %v143 = vand.u32 %v142, 4294901760
      %144 = vmatmul.f32.gmra.mxu0 %v143
      %v145 = vpop.f32.mrf.mxu0
      %v146 = vadd.f32 0.0, %v145
      %147 = vdwg.mxu0
      %148 = vmatpush.msra.mxu0 0.0
      %149 = vmatpush.msra.mxu0 0.0
      %150 = vmatpush.msra.mxu0 0.0
      %151 = vmatpush.msra.mxu0 0.0
      %152 = vmatpush.msra.mxu0 0.0
      %153 = vmatpush.msra.mxu0 0.0
      %154 = vmatpush.msra.mxu0 0.0
      %155 = vmatpush.msra.mxu0 0.0
      %156 = vmatpush.msra.mxu0 0.0
      %157 = vmatpush.msra.mxu0 0.0
      %158 = vmatpush.msra.mxu0 0.0
      %159 = vmatpush.msra.mxu0 0.0
      %160 = vmatpush.msra.mxu0 0.0
      %161 = vmatpush.msra.mxu0 0.0
      %v162 = vand.u32 %v114, 4294901760
      %v163 = vsub.f32 %v114, %v162
      %v164 = vand.u32 %v163, 4294901760
      %v165 = vsub.f32 %v163, %v164
      %v166 = vand.u32 %v165, 4294901760
      %167 = vmatpush.msra.mxu0 %v166
      %v168 = vand.u32 %v113, 4294901760
      %v169 = vsub.f32 %v113, %v168
      %v170 = vand.u32 %v169, 4294901760
      %v171 = vsub.f32 %v169, %v170
      %v172 = vand.u32 %v171, 4294901760
      %173 = vmatpush.msra.mxu0 %v172
      %v174 = vand.u32 %v119, 4294901760
      %175 = vmatmul.f32.gmra.mxu0 %v174
      %v176 = vpop.f32.mrf.mxu0
      %v177 = vadd.f32 %v146, %v176
      %178 = vdwg.mxu0
      %179 = vmatpush.msra.mxu0 0.0
      %180 = vmatpush.msra.mxu0 0.0
      %181 = vmatpush.msra.mxu0 0.0
      %182 = vmatpush.msra.mxu0 0.0
      %183 = vmatpush.msra.mxu0 0.0
      %184 = vmatpush.msra.mxu0 0.0
      %185 = vmatpush.msra.mxu0 0.0
      %186 = vmatpush.msra.mxu0 0.0
      %187 = vmatpush.msra.mxu0 0.0
      %188 = vmatpush.msra.mxu0 0.0
      %189 = vmatpush.msra.mxu0 0.0
      %190 = vmatpush.msra.mxu0 0.0
      %191 = vmatpush.msra.mxu0 0.0
      %192 = vmatpush.msra.mxu0 0.0
      %v193 = vand.u32 %v114, 4294901760
      %v194 = vsub.f32 %v114, %v193
      %195 = vmatpush.msra.mxu0 %v194
      %v196 = vand.u32 %v113, 4294901760
      %v197 = vsub.f32 %v113, %v196
      %198 = vmatpush.msra.mxu0 %v197
      %v199 = vand.u32 %v119, 4294901760
      %v200 = vsub.f32 %v119, %v199
      %201 = vmatmul.f32.gmra.mxu0 %v200
      %v202 = vpop.f32.mrf.mxu0
      %v203 = vadd.f32 %v177, %v202
      %204 = vdwg.mxu0
      %205 = vmatpush.msra.mxu0 0.0
      %206 = vmatpush.msra.mxu0 0.0
      %207 = vmatpush.msra.mxu0 0.0
      %208 = vmatpush.msra.mxu0 0.0
      %209 = vmatpush.msra.mxu0 0.0
      %210 = vmatpush.msra.mxu0 0.0
      %211 = vmatpush.msra.mxu0 0.0
      %212 = vmatpush.msra.mxu0 0.0
      %213 = vmatpush.msra.mxu0 0.0
      %214 = vmatpush.msra.mxu0 0.0
      %215 = vmatpush.msra.mxu0 0.0
      %216 = vmatpush.msra.mxu0 0.0
      %217 = vmatpush.msra.mxu0 0.0
      %218 = vmatpush.msra.mxu0 0.0
      %v219 = vand.u32 %v114, 4294901760
      %220 = vmatpush.msra.mxu0 %v219
      %v221 = vand.u32 %v113, 4294901760
      %222 = vmatpush.msra.mxu0 %v221
      %v223 = vand.u32 %v119, 4294901760
      %v224 = vsub.f32 %v119, %v223
      %v225 = vand.u32 %v224, 4294901760
      %226 = vmatmul.f32.gmra.mxu0 %v225
      %v227 = vpop.f32.mrf.mxu0
      %v228 = vadd.f32 %v203, %v227
      %229 = vdwg.mxu0
      %230 = vmatpush.msra.mxu0 0.0
      %231 = vmatpush.msra.mxu0 0.0
      %232 = vmatpush.msra.mxu0 0.0
      %233 = vmatpush.msra.mxu0 0.0
      %234 = vmatpush.msra.mxu0 0.0
      %235 = vmatpush.msra.mxu0 0.0
      %236 = vmatpush.msra.mxu0 0.0
      %237 = vmatpush.msra.mxu0 0.0
      %238 = vmatpush.msra.mxu0 0.0
      %239 = vmatpush.msra.mxu0 0.0
      %240 = vmatpush.msra.mxu0 0.0
      %241 = vmatpush.msra.mxu0 0.0
      %242 = vmatpush.msra.mxu0 0.0
      %243 = vmatpush.msra.mxu0 0.0
      %v244 = vand.u32 %v114, 4294901760
      %v245 = vsub.f32 %v114, %v244
      %v246 = vand.u32 %v245, 4294901760
      %247 = vmatpush.msra.mxu0 %v246
      %v248 = vand.u32 %v113, 4294901760
      %v249 = vsub.f32 %v113, %v248
      %v250 = vand.u32 %v249, 4294901760
      %251 = vmatpush.msra.mxu0 %v250
      %v252 = vand.u32 %v119, 4294901760
      %253 = vmatmul.f32.gmra.mxu0 %v252
      %v254 = vpop.f32.mrf.mxu0
      %v255 = vadd.f32 %v228, %v254
      %256 = vdwg.mxu0
      %257 = vmatpush.msra.mxu0 0.0
      %258 = vmatpush.msra.mxu0 0.0
      %259 = vmatpush.msra.mxu0 0.0
      %260 = vmatpush.msra.mxu0 0.0
      %261 = vmatpush.msra.mxu0 0.0
      %262 = vmatpush.msra.mxu0 0.0
      %263 = vmatpush.msra.mxu0 0.0
      %264 = vmatpush.msra.mxu0 0.0
      %265 = vmatpush.msra.mxu0 0.0
      %266 = vmatpush.msra.mxu0 0.0
      %267 = vmatpush.msra.mxu0 0.0
      %268 = vmatpush.msra.mxu0 0.0
      %269 = vmatpush.msra.mxu0 0.0
      %270 = vmatpush.msra.mxu0 0.0
      %v271 = vand.u32 %v114, 4294901760
      %272 = vmatpush.msra.mxu0 %v271
      %v273 = vand.u32 %v113, 4294901760
      %274 = vmatpush.msra.mxu0 %v273
      %v275 = vand.u32 %v119, 4294901760
      %276 = vmatmul.f32.gmra.mxu0 %v275
      %v277 = vpop.f32.mrf.mxu0
      %v278 = vadd.f32 %v255, %v277
      %279 = vdwg.mxu0
      %vm280 = vcmask 261120
      %v282 = vsel %vm280, %v106, 0
      %284 = vmatpush.msra.mxu0 0.0
      %285 = vmatpush.msra.mxu0 0.0
      %286 = vmatpush.msra.mxu0 0.0
      %287 = vmatpush.msra.mxu0 0.0
      %288 = vmatpush.msra.mxu0 0.0
      %289 = vmatpush.msra.mxu0 0.0
      %290 = vmatpush.msra.mxu0 0.0
      %291 = vmatpush.msra.mxu0 0.0
      %292 = vmatpush.msra.mxu0 0.0
      %293 = vmatpush.msra.mxu0 0.0
      %294 = vmatpush.msra.mxu0 0.0
      %295 = vmatpush.msra.mxu0 0.0
      %v296 = vand.u32 %v112, 4294901760
      %297 = vmatpush.msra.mxu0 %v296
      %v298 = vand.u32 %v111, 4294901760
      %299 = vmatpush.msra.mxu0 %v298
      %v300 = vand.u32 %v110, 4294901760
      %301 = vmatpush.msra.mxu0 %v300
      %v302 = vand.u32 %v109, 4294901760
      %303 = vmatpush.msra.mxu0 %v302
      %v304 = vand.u32 %v282, 4294901760
      %v305 = vsub.f32 %v282, %v304
      %v306 = vand.u32 %v305, 4294901760
      %v307 = vsub.f32 %v305, %v306
      %v308 = vand.u32 %v307, 4294901760
      %309 = vmatmul.f32.gmra.mxu0 %v308
      %v310 = vpop.f32.mrf.mxu0
      %v311 = vadd.f32 %v278, %v310
      %312 = vdwg.mxu0
      %313 = vmatpush.msra.mxu0 0.0
      %314 = vmatpush.msra.mxu0 0.0
      %315 = vmatpush.msra.mxu0 0.0
      %316 = vmatpush.msra.mxu0 0.0
      %317 = vmatpush.msra.mxu0 0.0
      %318 = vmatpush.msra.mxu0 0.0
      %319 = vmatpush.msra.mxu0 0.0
      %320 = vmatpush.msra.mxu0 0.0
      %321 = vmatpush.msra.mxu0 0.0
      %322 = vmatpush.msra.mxu0 0.0
      %323 = vmatpush.msra.mxu0 0.0
      %324 = vmatpush.msra.mxu0 0.0
      %v325 = vand.u32 %v112, 4294901760
      %v326 = vsub.f32 %v112, %v325
      %v327 = vand.u32 %v326, 4294901760
      %v328 = vsub.f32 %v326, %v327
      %v329 = vand.u32 %v328, 4294901760
      %330 = vmatpush.msra.mxu0 %v329
      %v331 = vand.u32 %v111, 4294901760
      %v332 = vsub.f32 %v111, %v331
      %v333 = vand.u32 %v332, 4294901760
      %v334 = vsub.f32 %v332, %v333
      %v335 = vand.u32 %v334, 4294901760
      %336 = vmatpush.msra.mxu0 %v335
      %v337 = vand.u32 %v110, 4294901760
      %v338 = vsub.f32 %v110, %v337
      %v339 = vand.u32 %v338, 4294901760
      %v340 = vsub.f32 %v338, %v339
      %v341 = vand.u32 %v340, 4294901760
      %342 = vmatpush.msra.mxu0 %v341
      %v343 = vand.u32 %v109, 4294901760
      %v344 = vsub.f32 %v109, %v343
      %v345 = vand.u32 %v344, 4294901760
      %v346 = vsub.f32 %v344, %v345
      %v347 = vand.u32 %v346, 4294901760
      %348 = vmatpush.msra.mxu0 %v347
      %v349 = vand.u32 %v282, 4294901760
      %350 = vmatmul.f32.gmra.mxu0 %v349
      %v351 = vpop.f32.mrf.mxu0
      %v352 = vadd.f32 %v311, %v351
      %353 = vdwg.mxu0
      %354 = vmatpush.msra.mxu0 0.0
      %355 = vmatpush.msra.mxu0 0.0
      %356 = vmatpush.msra.mxu0 0.0
      %357 = vmatpush.msra.mxu0 0.0
      %358 = vmatpush.msra.mxu0 0.0
      %359 = vmatpush.msra.mxu0 0.0
      %360 = vmatpush.msra.mxu0 0.0
      %361 = vmatpush.msra.mxu0 0.0
      %362 = vmatpush.msra.mxu0 0.0
      %363 = vmatpush.msra.mxu0 0.0
      %364 = vmatpush.msra.mxu0 0.0
      %365 = vmatpush.msra.mxu0 0.0
      %v366 = vand.u32 %v112, 4294901760
      %v367 = vsub.f32 %v112, %v366
      %368 = vmatpush.msra.mxu0 %v367
      %v369 = vand.u32 %v111, 4294901760
      %v370 = vsub.f32 %v111, %v369
      %371 = vmatpush.msra.mxu0 %v370
      %v372 = vand.u32 %v110, 4294901760
      %v373 = vsub.f32 %v110, %v372
      %374 = vmatpush.msra.mxu0 %v373
      %v375 = vand.u32 %v109, 4294901760
      %v376 = vsub.f32 %v109, %v375
      %377 = vmatpush.msra.mxu0 %v376
      %v378 = vand.u32 %v282, 4294901760
      %v379 = vsub.f32 %v282, %v378
      %380 = vmatmul.f32.gmra.mxu0 %v379
      %v381 = vpop.f32.mrf.mxu0
      %v382 = vadd.f32 %v352, %v381
      %383 = vdwg.mxu0
      %384 = vmatpush.msra.mxu0 0.0
      %385 = vmatpush.msra.mxu0 0.0
      %386 = vmatpush.msra.mxu0 0.0
      %387 = vmatpush.msra.mxu0 0.0
      %388 = vmatpush.msra.mxu0 0.0
      %389 = vmatpush.msra.mxu0 0.0
      %390 = vmatpush.msra.mxu0 0.0
      %391 = vmatpush.msra.mxu0 0.0
      %392 = vmatpush.msra.mxu0 0.0
      %393 = vmatpush.msra.mxu0 0.0
      %394 = vmatpush.msra.mxu0 0.0
      %395 = vmatpush.msra.mxu0 0.0
      %v396 = vand.u32 %v112, 4294901760
      %397 = vmatpush.msra.mxu0 %v396
      %v398 = vand.u32 %v111, 4294901760
      %399 = vmatpush.msra.mxu0 %v398
      %v400 = vand.u32 %v110, 4294901760
      %401 = vmatpush.msra.mxu0 %v400
      %v402 = vand.u32 %v109, 4294901760
      %403 = vmatpush.msra.mxu0 %v402
      %v404 = vand.u32 %v282, 4294901760
      %v405 = vsub.f32 %v282, %v404
      %v406 = vand.u32 %v405, 4294901760
      %407 = vmatmul.f32.gmra.mxu0 %v406
      %v408 = vpop.f32.mrf.mxu0
      %v409 = vadd.f32 %v382, %v408
      %410 = vdwg.mxu0
      %411 = vmatpush.msra.mxu0 0.0
      %412 = vmatpush.msra.mxu0 0.0
      %413 = vmatpush.msra.mxu0 0.0
      %414 = vmatpush.msra.mxu0 0.0
      %415 = vmatpush.msra.mxu0 0.0
      %416 = vmatpush.msra.mxu0 0.0
      %417 = vmatpush.msra.mxu0 0.0
      %418 = vmatpush.msra.mxu0 0.0
      %419 = vmatpush.msra.mxu0 0.0
      %420 = vmatpush.msra.mxu0 0.0
      %421 = vmatpush.msra.mxu0 0.0
      %422 = vmatpush.msra.mxu0 0.0
      %v423 = vand.u32 %v112, 4294901760
      %v424 = vsub.f32 %v112, %v423
      %v425 = vand.u32 %v424, 4294901760
      %426 = vmatpush.msra.mxu0 %v425
      %v427 = vand.u32 %v111, 4294901760
      %v428 = vsub.f32 %v111, %v427
      %v429 = vand.u32 %v428, 4294901760
      %430 = vmatpush.msra.mxu0 %v429
      %v431 = vand.u32 %v110, 4294901760
      %v432 = vsub.f32 %v110, %v431
      %v433 = vand.u32 %v432, 4294901760
      %434 = vmatpush.msra.mxu0 %v433
      %v435 = vand.u32 %v109, 4294901760
      %v436 = vsub.f32 %v109, %v435
      %v437 = vand.u32 %v436, 4294901760
      %438 = vmatpush.msra.mxu0 %v437
      %v439 = vand.u32 %v282, 4294901760
      %440 = vmatmul.f32.gmra.mxu0 %v439
      %v441 = vpop.f32.mrf.mxu0
      %v442 = vadd.f32 %v409, %v441
      %443 = vdwg.mxu0
      %444 = vmatpush.msra.mxu0 0.0
      %445 = vmatpush.msra.mxu0 0.0
      %446 = vmatpush.msra.mxu0 0.0
      %447 = vmatpush.msra.mxu0 0.0
      %448 = vmatpush.msra.mxu0 0.0
      %449 = vmatpush.msra.mxu0 0.0
      %450 = vmatpush.msra.mxu0 0.0
      %451 = vmatpush.msra.mxu0 0.0
      %452 = vmatpush.msra.mxu0 0.0
      %453 = vmatpush.msra.mxu0 0.0
      %454 = vmatpush.msra.mxu0 0.0
      %455 = vmatpush.msra.mxu0 0.0
      %v456 = vand.u32 %v112, 4294901760
      %457 = vmatpush.msra.mxu0 %v456
      %v458 = vand.u32 %v111, 4294901760
      %459 = vmatpush.msra.mxu0 %v458
      %v460 = vand.u32 %v110, 4294901760
      %461 = vmatpush.msra.mxu0 %v460
      %v462 = vand.u32 %v109, 4294901760
      %463 = vmatpush.msra.mxu0 %v462
      %v464 = vand.u32 %v282, 4294901760
      %465 = vmatmul.f32.gmra.mxu0 %v464
      %v466 = vpop.f32.mrf.mxu0
      %v467 = vadd.f32 %v442, %v466
      %468 = vdwg.mxu0
      %v469 = vld [vmem:[%s4] sm:$0x1]
      %v471 = vperm.slane %v469, 0
      %v473 = vadd.f32 %v467, %v471
      %v474 = vxor.u32 %v473, 2147483648
      %v475 = vmul.f32 %v474, 1.442695
      %v476 = vpow.pop %v475
      %v477 = vadd.f32 %v476, 1.0
      %v478 = vrcp.pop %v477
      %v479 = vmul.f32 %v477, %v478
      %v480 = vsub.f32 1.0, %v479
      %v481 = vmul.f32 %v478, %v480
      %v482 = vadd.f32 %v478, %v481
      %vm483 = vweird.f32 %v477
      %vm484 = vweird.f32 %v478
      %vm485 = vmor %vm483, %vm484
      %v486 = vsel %vm485, %v478, %v482
      %v487 = vand.u32 2147483647, %v477
      %vm488 = vcmp.eq.f32.partialorder %v487, 8.507059e+37
      %v489 = vand.u32 %v477, 2147483648
      %v490 = vor.u32 1.1754944e-38, %v489
      %v491 = vsel %vm488, %v490, %v486
      %v492 = vmul.f32 1.0, %v491
      %v493 = vtanh.pop %v473
      %v494 = vmul.f32 %v492, %v100
      %496 = vrot.lane.b32.xlu0 %v493, 96
      %v497 = vpop.permute.xlu0 %496
      %v499 = vmul.f32 %v492, %v497
      %501 = vrot.lane.b32.xlu0 %v499, 16
      %v502 = vpop.permute.xlu0 %501
      %v504 = vadd.f32 %v494, %v502
      %v505 = vtanh.pop %v504
      %507 = vrot.lane.b32.xlu0 %v505, 32
      %v508 = vpop.permute.xlu0 %507
      %v510 = vmul.f32 %v492, %v508
      %512 = vset.pattern.permute.xlu0 0
      %513 = vperm.xlu0 %512, %v108
      %v514 = vpop.permute.xlu0 %513
      %v516 = vmul.f32 %v514, %v510
      %v517 = vsub.f32 1.0, %v108
      %519 = vset.pattern.permute.xlu0 0
      %520 = vperm.xlu0 %519, %v517
      %v521 = vpop.permute.xlu0 %520
      %v523 = vmul.f32 %v521, %v99
      %v524 = vadd.f32 %v516, %v523
      %v525 = vmul.f32 %v514, %v504
      %v526 = vmul.f32 %v521, %v100
      %v527 = vadd.f32 %v525, %v526
      %v528 = vmul.f32 %v514, %v524
      %530 = vrot.lane.b32.xlu0 %v528, 80
      %v531 = vpop.permute.xlu0 %530
      %s533 = scalar_lea.vmem [#allocation10], %s104
      %vm534 = vcmask 123904
      %535 = vst.msk [vmem:[%s533] sm:$0x3] %vm534, %v531
      %s536 = smul.u32 %s103, 2
      %s537 = scalar_lea.vmem %s0, %s536
      %v538 = vld [vmem:[%s537] sm:$0x3]
      %s539 = scalar_lea.vmem %s1, %s536
      %v540 = vld [vmem:[%s539] sm:$0x3]
      %v541 = vld [vmem:[#allocation7] sm:$0xff]
      %v542 = vld [vmem:[#allocation7 + $0x8] sm:$0xff]
      %v543 = vld [vmem:[#allocation7 + $0x10] sm:$0xff]
      %v544 = vld [vmem:[#allocation7 + $0x18] sm:$0xff]
      %v545 = vld [vmem:[#allocation8] sm:$0xff]
      %v546 = vld [vmem:[#allocation8 + $0x8] sm:$0xff]
      %548 = vrot.lane.b32.xlu0 %v101, 80
      %v549 = vpop.permute.xlu0 %548
      %v550 = vsel %vm118, %v549, 0
      %552 = vmatpush.msra.mxu0 0.0
      %553 = vmatpush.msra.mxu0 0.0
      %554 = vmatpush.msra.mxu0 0.0
      %555 = vmatpush.msra.mxu0 0.0
      %556 = vmatpush.msra.mxu0 0.0
      %557 = vmatpush.msra.mxu0 0.0
      %558 = vmatpush.msra.mxu0 0.0
      %559 = vmatpush.msra.mxu0 0.0
      %560 = vmatpush.msra.mxu0 0.0
      %561 = vmatpush.msra.mxu0 0.0
      %562 = vmatpush.msra.mxu0 0.0
      %563 = vmatpush.msra.mxu0 0.0
      %564 = vmatpush.msra.mxu0 0.0
      %565 = vmatpush.msra.mxu0 0.0
      %v566 = vand.u32 %v546, 4294901760
      %567 = vmatpush.msra.mxu0 %v566
      %v568 = vand.u32 %v545, 4294901760
      %569 = vmatpush.msra.mxu0 %v568
      %v570 = vand.u32 %v550, 4294901760
      %v571 = vsub.f32 %v550, %v570
      %v572 = vand.u32 %v571, 4294901760
      %v573 = vsub.f32 %v571, %v572
      %v574 = vand.u32 %v573, 4294901760
      %575 = vmatmul.f32.gmra.mxu0 %v574
      %v576 = vpop.f32.mrf.mxu0
      %v577 = vadd.f32 0.0, %v576
      %578 = vdwg.mxu0
      %579 = vmatpush.msra.mxu0 0.0
      %580 = vmatpush.msra.mxu0 0.0
      %581 = vmatpush.msra.mxu0 0.0
      %582 = vmatpush.msra.mxu0 0.0
      %583 = vmatpush.msra.mxu0 0.0
      %584 = vmatpush.msra.mxu0 0.0
      %585 = vmatpush.msra.mxu0 0.0
      %586 = vmatpush.msra.mxu0 0.0
      %587 = vmatpush.msra.mxu0 0.0
      %588 = vmatpush.msra.mxu0 0.0
      %589 = vmatpush.msra.mxu0 0.0
      %590 = vmatpush.msra.mxu0 0.0
      %591 = vmatpush.msra.mxu0 0.0
      %592 = vmatpush.msra.mxu0 0.0
      %v593 = vand.u32 %v546, 4294901760
      %v594 = vsub.f32 %v546, %v593
      %v595 = vand.u32 %v594, 4294901760
      %v596 = vsub.f32 %v594, %v595
      %v597 = vand.u32 %v596, 4294901760
      %598 = vmatpush.msra.mxu0 %v597
      %v599 = vand.u32 %v545, 4294901760
      %v600 = vsub.f32 %v545, %v599
      %v601 = vand.u32 %v600, 4294901760
      %v602 = vsub.f32 %v600, %v601
      %v603 = vand.u32 %v602, 4294901760
      %604 = vmatpush.msra.mxu0 %v603
      %v605 = vand.u32 %v550, 4294901760
      %606 = vmatmul.f32.gmra.mxu0 %v605
      %v607 = vpop.f32.mrf.mxu0
      %v608 = vadd.f32 %v577, %v607
      %609 = vdwg.mxu0
      %610 = vmatpush.msra.mxu0 0.0
      %611 = vmatpush.msra.mxu0 0.0
      %612 = vmatpush.msra.mxu0 0.0
      %613 = vmatpush.msra.mxu0 0.0
      %614 = vmatpush.msra.mxu0 0.0
      %615 = vmatpush.msra.mxu0 0.0
      %616 = vmatpush.msra.mxu0 0.0
      %617 = vmatpush.msra.mxu0 0.0
      %618 = vmatpush.msra.mxu0 0.0
      %619 = vmatpush.msra.mxu0 0.0
      %620 = vmatpush.msra.mxu0 0.0
      %621 = vmatpush.msra.mxu0 0.0
      %622 = vmatpush.msra.mxu0 0.0
      %623 = vmatpush.msra.mxu0 0.0
      %v624 = vand.u32 %v546, 4294901760
      %v625 = vsub.f32 %v546, %v624
      %626 = vmatpush.msra.mxu0 %v625
      %v627 = vand.u32 %v545, 4294901760
      %v628 = vsub.f32 %v545, %v627
      %629 = vmatpush.msra.mxu0 %v628
      %v630 = vand.u32 %v550, 4294901760
      %v631 = vsub.f32 %v550, %v630
      %632 = vmatmul.f32.gmra.mxu0 %v631
      %v633 = vpop.f32.mrf.mxu0
      %v634 = vadd.f32 %v608, %v633
      %635 = vdwg.mxu0
      %636 = vmatpush.msra.mxu0 0.0
      %637 = vmatpush.msra.mxu0 0.0
      %638 = vmatpush.msra.mxu0 0.0
      %639 = vmatpush.msra.mxu0 0.0
      %640 = vmatpush.msra.mxu0 0.0
      %641 = vmatpush.msra.mxu0 0.0
      %642 = vmatpush.msra.mxu0 0.0
      %643 = vmatpush.msra.mxu0 0.0
      %644 = vmatpush.msra.mxu0 0.0
      %645 = vmatpush.msra.mxu0 0.0
      %646 = vmatpush.msra.mxu0 0.0
      %647 = vmatpush.msra.mxu0 0.0
      %648 = vmatpush.msra.mxu0 0.0
      %649 = vmatpush.msra.mxu0 0.0
      %v650 = vand.u32 %v546, 4294901760
      %651 = vmatpush.msra.mxu0 %v650
      %v652 = vand.u32 %v545, 4294901760
      %653 = vmatpush.msra.mxu0 %v652
      %v654 = vand.u32 %v550, 4294901760
      %v655 = vsub.f32 %v550, %v654
      %v656 = vand.u32 %v655, 4294901760
      %657 = vmatmul.f32.gmra.mxu0 %v656
      %v658 = vpop.f32.mrf.mxu0
      %v659 = vadd.f32 %v634, %v658
      %660 = vdwg.mxu0
      %661 = vmatpush.msra.mxu0 0.0
      %662 = vmatpush.msra.mxu0 0.0
      %663 = vmatpush.msra.mxu0 0.0
      %664 = vmatpush.msra.mxu0 0.0
      %665 = vmatpush.msra.mxu0 0.0
      %666 = vmatpush.msra.mxu0 0.0
      %667 = vmatpush.msra.mxu0 0.0
      %668 = vmatpush.msra.mxu0 0.0
      %669 = vmatpush.msra.mxu0 0.0
      %670 = vmatpush.msra.mxu0 0.0
      %671 = vmatpush.msra.mxu0 0.0
      %672 = vmatpush.msra.mxu0 0.0
      %673 = vmatpush.msra.mxu0 0.0
      %674 = vmatpush.msra.mxu0 0.0
      %v675 = vand.u32 %v546, 4294901760
      %v676 = vsub.f32 %v546, %v675
      %v677 = vand.u32 %v676, 4294901760
      %678 = vmatpush.msra.mxu0 %v677
      %v679 = vand.u32 %v545, 4294901760
      %v680 = vsub.f32 %v545, %v679
      %v681 = vand.u32 %v680, 4294901760
      %682 = vmatpush.msra.mxu0 %v681
      %v683 = vand.u32 %v550, 4294901760
      %684 = vmatmul.f32.gmra.mxu0 %v683
      %v685 = vpop.f32.mrf.mxu0
      %v686 = vadd.f32 %v659, %v685
      %687 = vdwg.mxu0
      %688 = vmatpush.msra.mxu0 0.0
      %689 = vmatpush.msra.mxu0 0.0
      %690 = vmatpush.msra.mxu0 0.0
      %691 = vmatpush.msra.mxu0 0.0
      %692 = vmatpush.msra.mxu0 0.0
      %693 = vmatpush.msra.mxu0 0.0
      %694 = vmatpush.msra.mxu0 0.0
      %695 = vmatpush.msra.mxu0 0.0
      %696 = vmatpush.msra.mxu0 0.0
      %697 = vmatpush.msra.mxu0 0.0
      %698 = vmatpush.msra.mxu0 0.0
      %699 = vmatpush.msra.mxu0 0.0
      %700 = vmatpush.msra.mxu0 0.0
      %701 = vmatpush.msra.mxu0 0.0
      %v702 = vand.u32 %v546, 4294901760
      %703 = vmatpush.msra.mxu0 %v702
      %v704 = vand.u32 %v545, 4294901760
      %705 = vmatpush.msra.mxu0 %v704
      %v706 = vand.u32 %v550, 4294901760
      %707 = vmatmul.f32.gmra.mxu0 %v706
      %v708 = vpop.f32.mrf.mxu0
      %v709 = vadd.f32 %v686, %v708
      %710 = vdwg.mxu0
      %v712 = vsel %vm280, %v538, 0
      %714 = vmatpush.msra.mxu0 0.0
      %715 = vmatpush.msra.mxu0 0.0
      %716 = vmatpush.msra.mxu0 0.0
      %717 = vmatpush.msra.mxu0 0.0
      %718 = vmatpush.msra.mxu0 0.0
      %719 = vmatpush.msra.mxu0 0.0
      %720 = vmatpush.msra.mxu0 0.0
      %721 = vmatpush.msra.mxu0 0.0
      %722 = vmatpush.msra.mxu0 0.0
      %723 = vmatpush.msra.mxu0 0.0
      %724 = vmatpush.msra.mxu0 0.0
      %725 = vmatpush.msra.mxu0 0.0
      %v726 = vand.u32 %v544, 4294901760
      %727 = vmatpush.msra.mxu0 %v726
      %v728 = vand.u32 %v543, 4294901760
      %729 = vmatpush.msra.mxu0 %v728
      %v730 = vand.u32 %v542, 4294901760
      %731 = vmatpush.msra.mxu0 %v730
      %v732 = vand.u32 %v541, 4294901760
      %733 = vmatpush.msra.mxu0 %v732
      %v734 = vand.u32 %v712, 4294901760
      %v735 = vsub.f32 %v712, %v734
      %v736 = vand.u32 %v735, 4294901760
      %v737 = vsub.f32 %v735, %v736
      %v738 = vand.u32 %v737, 4294901760
      %739 = vmatmul.f32.gmra.mxu0 %v738
      %v740 = vpop.f32.mrf.mxu0
      %v741 = vadd.f32 %v709, %v740
      %742 = vdwg.mxu0
      %743 = vmatpush.msra.mxu0 0.0
      %744 = vmatpush.msra.mxu0 0.0
      %745 = vmatpush.msra.mxu0 0.0
      %746 = vmatpush.msra.mxu0 0.0
      %747 = vmatpush.msra.mxu0 0.0
      %748 = vmatpush.msra.mxu0 0.0
      %749 = vmatpush.msra.mxu0 0.0
      %750 = vmatpush.msra.mxu0 0.0
      %751 = vmatpush.msra.mxu0 0.0
      %752 = vmatpush.msra.mxu0 0.0
      %753 = vmatpush.msra.mxu0 0.0
      %754 = vmatpush.msra.mxu0 0.0
      %v755 = vand.u32 %v544, 4294901760
      %v756 = vsub.f32 %v544, %v755
      %v757 = vand.u32 %v756, 4294901760
      %v758 = vsub.f32 %v756, %v757
      %v759 = vand.u32 %v758, 4294901760
      %760 = vmatpush.msra.mxu0 %v759
      %v761 = vand.u32 %v543, 4294901760
      %v762 = vsub.f32 %v543, %v761
      %v763 = vand.u32 %v762, 4294901760
      %v764 = vsub.f32 %v762, %v763
      %v765 = vand.u32 %v764, 4294901760
      %766 = vmatpush.msra.mxu0 %v765
      %v767 = vand.u32 %v542, 4294901760
      %v768 = vsub.f32 %v542, %v767
      %v769 = vand.u32 %v768, 4294901760
      %v770 = vsub.f32 %v768, %v769
      %v771 = vand.u32 %v770, 4294901760
      %772 = vmatpush.msra.mxu0 %v771
      %v773 = vand.u32 %v541, 4294901760
      %v774 = vsub.f32 %v541, %v773
      %v775 = vand.u32 %v774, 4294901760
      %v776 = vsub.f32 %v774, %v775
      %v777 = vand.u32 %v776, 4294901760
      %778 = vmatpush.msra.mxu0 %v777
      %v779 = vand.u32 %v712, 4294901760
      %780 = vmatmul.f32.gmra.mxu0 %v779
      %v781 = vpop.f32.mrf.mxu0
      %v782 = vadd.f32 %v741, %v781
      %783 = vdwg.mxu0
      %784 = vmatpush.msra.mxu0 0.0
      %785 = vmatpush.msra.mxu0 0.0
      %786 = vmatpush.msra.mxu0 0.0
      %787 = vmatpush.msra.mxu0 0.0
      %788 = vmatpush.msra.mxu0 0.0
      %789 = vmatpush.msra.mxu0 0.0
      %790 = vmatpush.msra.mxu0 0.0
      %791 = vmatpush.msra.mxu0 0.0
      %792 = vmatpush.msra.mxu0 0.0
      %793 = vmatpush.msra.mxu0 0.0
      %794 = vmatpush.msra.mxu0 0.0
      %795 = vmatpush.msra.mxu0 0.0
      %v796 = vand.u32 %v544, 4294901760
      %v797 = vsub.f32 %v544, %v796
      %798 = vmatpush.msra.mxu0 %v797
      %v799 = vand.u32 %v543, 4294901760
      %v800 = vsub.f32 %v543, %v799
      %801 = vmatpush.msra.mxu0 %v800
      %v802 = vand.u32 %v542, 4294901760
      %v803 = vsub.f32 %v542, %v802
      %804 = vmatpush.msra.mxu0 %v803
      %v805 = vand.u32 %v541, 4294901760
      %v806 = vsub.f32 %v541, %v805
      %807 = vmatpush.msra.mxu0 %v806
      %v808 = vand.u32 %v712, 4294901760
      %v809 = vsub.f32 %v712, %v808
      %810 = vmatmul.f32.gmra.mxu0 %v809
      %v811 = vpop.f32.mrf.mxu0
      %v812 = vadd.f32 %v782, %v811
      %813 = vdwg.mxu0
      %814 = vmatpush.msra.mxu0 0.0
      %815 = vmatpush.msra.mxu0 0.0
      %816 = vmatpush.msra.mxu0 0.0
      %817 = vmatpush.msra.mxu0 0.0
      %818 = vmatpush.msra.mxu0 0.0
      %819 = vmatpush.msra.mxu0 0.0
      %820 = vmatpush.msra.mxu0 0.0
      %821 = vmatpush.msra.mxu0 0.0
      %822 = vmatpush.msra.mxu0 0.0
      %823 = vmatpush.msra.mxu0 0.0
      %824 = vmatpush.msra.mxu0 0.0
      %825 = vmatpush.msra.mxu0 0.0
      %v826 = vand.u32 %v544, 4294901760
      %827 = vmatpush.msra.mxu0 %v826
      %v828 = vand.u32 %v543, 4294901760
      %829 = vmatpush.msra.mxu0 %v828
      %v830 = vand.u32 %v542, 4294901760
      %831 = vmatpush.msra.mxu0 %v830
      %v832 = vand.u32 %v541, 4294901760
      %833 = vmatpush.msra.mxu0 %v832
      %v834 = vand.u32 %v712, 4294901760
      %v835 = vsub.f32 %v712, %v834
      %v836 = vand.u32 %v835, 4294901760
      %837 = vmatmul.f32.gmra.mxu0 %v836
      %v838 = vpop.f32.mrf.mxu0
      %v839 = vadd.f32 %v812, %v838
      %840 = vdwg.mxu0
      %841 = vmatpush.msra.mxu0 0.0
      %842 = vmatpush.msra.mxu0 0.0
      %843 = vmatpush.msra.mxu0 0.0
      %844 = vmatpush.msra.mxu0 0.0
      %845 = vmatpush.msra.mxu0 0.0
      %846 = vmatpush.msra.mxu0 0.0
      %847 = vmatpush.msra.mxu0 0.0
      %848 = vmatpush.msra.mxu0 0.0
      %849 = vmatpush.msra.mxu0 0.0
      %850 = vmatpush.msra.mxu0 0.0
      %851 = vmatpush.msra.mxu0 0.0
      %852 = vmatpush.msra.mxu0 0.0
      %v853 = vand.u32 %v544, 4294901760
      %v854 = vsub.f32 %v544, %v853
      %v855 = vand.u32 %v854, 4294901760
      %856 = vmatpush.msra.mxu0 %v855
      %v857 = vand.u32 %v543, 4294901760
      %v858 = vsub.f32 %v543, %v857
      %v859 = vand.u32 %v858, 4294901760
      %860 = vmatpush.msra.mxu0 %v859
      %v861 = vand.u32 %v542, 4294901760
      %v862 = vsub.f32 %v542, %v861
      %v863 = vand.u32 %v862, 4294901760
      %864 = vmatpush.msra.mxu0 %v863
      %v865 = vand.u32 %v541, 4294901760
      %v866 = vsub.f32 %v541, %v865
      %v867 = vand.u32 %v866, 4294901760
      %868 = vmatpush.msra.mxu0 %v867
      %v869 = vand.u32 %v712, 4294901760
      %870 = vmatmul.f32.gmra.mxu0 %v869
      %v871 = vpop.f32.mrf.mxu0
      %v872 = vadd.f32 %v839, %v871
      %873 = vdwg.mxu0
      %874 = vmatpush.msra.mxu0 0.0
      %875 = vmatpush.msra.mxu0 0.0
      %876 = vmatpush.msra.mxu0 0.0
      %877 = vmatpush.msra.mxu0 0.0
      %878 = vmatpush.msra.mxu0 0.0
      %879 = vmatpush.msra.mxu0 0.0
      %880 = vmatpush.msra.mxu0 0.0
      %881 = vmatpush.msra.mxu0 0.0
      %882 = vmatpush.msra.mxu0 0.0
      %883 = vmatpush.msra.mxu0 0.0
      %884 = vmatpush.msra.mxu0 0.0
      %885 = vmatpush.msra.mxu0 0.0
      %v886 = vand.u32 %v544, 4294901760
      %887 = vmatpush.msra.mxu0 %v886
      %v888 = vand.u32 %v543, 4294901760
      %889 = vmatpush.msra.mxu0 %v888
      %v890 = vand.u32 %v542, 4294901760
      %891 = vmatpush.msra.mxu0 %v890
      %v892 = vand.u32 %v541, 4294901760
      %893 = vmatpush.msra.mxu0 %v892
      %v894 = vand.u32 %v712, 4294901760
      %895 = vmatmul.f32.gmra.mxu0 %v894
      %v896 = vpop.f32.mrf.mxu0
      %v897 = vadd.f32 %v872, %v896
      %898 = vdwg.mxu0
      %v899 = vld [vmem:[%s7] sm:$0x1]
      %v901 = vperm.slane %v899, 0
      %v903 = vadd.f32 %v897, %v901
      %v904 = vxor.u32 %v903, 2147483648
      %v905 = vmul.f32 %v904, 1.442695
      %v906 = vpow.pop %v905
      %v907 = vadd.f32 %v906, 1.0
      %v908 = vrcp.pop %v907
      %v909 = vmul.f32 %v907, %v908
      %v910 = vsub.f32 1.0, %v909
      %v911 = vmul.f32 %v908, %v910
      %v912 = vadd.f32 %v908, %v911
      %vm913 = vweird.f32 %v907
      %vm914 = vweird.f32 %v908
      %vm915 = vmor %vm913, %vm914
      %v916 = vsel %vm915, %v908, %v912
      %v917 = vand.u32 2147483647, %v907
      %vm918 = vcmp.eq.f32.partialorder %v917, 8.507059e+37
      %v919 = vand.u32 %v907, 2147483648
      %v920 = vor.u32 1.1754944e-38, %v919
      %v921 = vsel %vm918, %v920, %v916
      %v922 = vmul.f32 1.0, %v921
      %v923 = vtanh.pop %v903
      %v924 = vmul.f32 %v922, %v102
      %926 = vrot.lane.b32.xlu0 %v923, 96
      %v927 = vpop.permute.xlu0 %926
      %v929 = vmul.f32 %v922, %v927
      %931 = vrot.lane.b32.xlu0 %v929, 16
      %v932 = vpop.permute.xlu0 %931
      %v934 = vadd.f32 %v924, %v932
      %v935 = vtanh.pop %v934
      %937 = vrot.lane.b32.xlu0 %v935, 32
      %v938 = vpop.permute.xlu0 %937
      %v940 = vmul.f32 %v922, %v938
      %942 = vset.pattern.permute.xlu0 0
      %943 = vperm.xlu0 %942, %v540
      %v944 = vpop.permute.xlu0 %943
      %v946 = vmul.f32 %v944, %v940
      %v947 = vsub.f32 1.0, %v540
      %949 = vset.pattern.permute.xlu0 0
      %950 = vperm.xlu0 %949, %v947
      %v951 = vpop.permute.xlu0 %950
      %v953 = vmul.f32 %v951, %v101
      %v954 = vadd.f32 %v946, %v953
      %v955 = vmul.f32 %v944, %v934
      %v956 = vmul.f32 %v951, %v102
      %v957 = vadd.f32 %v955, %v956
      %v958 = vmul.f32 %v944, %v954
      %960 = vrot.lane.b32.xlu0 %v958, 96
      %v961 = vpop.permute.xlu0 %960
      %s963 = scalar_lea.vmem [#allocation10], %s536
      %vm964 = vcmask 255104
      %965 = vst.msk [vmem:[%s963] sm:$0x3] %vm964, %v961
    $region54: #{tpu_custom_call.1} parent=1 // loop_footer
      %s98 = sadd.s32 1, %s94
    $region55: #{tpu_custom_call.1} parent=1 // loop_footer_branch
      %93 = sbr.rel target = $region51
    $region56: #{tpu_custom_call.1} parent=1 // loop_exit
      _
    // Predicated region
    $region57: #{tpu_custom_call.1} parent=1 // pred_check
      _
    $region58: #{tpu_custom_call.1} parent=1 // pred_check_branch
      %967 = sbr.rel (0) target = $region60
    $region59: #{tpu_custom_call.1} parent=1 // pred_region
      %969 = vsyncadd [#allocation4], 0
      %s970 = sshll.u32 [#allocation10], 4
      %s971 = int_to_ptr.vmem [resolvable:$true] %s970
      %s972 = sshll.u32 %s8, 4
      %s973 = int_to_ptr.hbm [resolvable:$true] %s972
      %978 = dma.vmem_to_hbm [thread:$0]  %s971, 256, %s973, [#allocation4], 32, 32, 2
    $region60: #{tpu_custom_call.1} parent=1 // pred_fallthru
      _
    // Predicated region
    $region61: #{tpu_custom_call.1} parent=1 // pred_check
      _
    $region62: #{tpu_custom_call.1} parent=1 // pred_check_branch
      %980 = sbr.rel (0) target = $region64
    $region63: #{tpu_custom_call.1} parent=1 // pred_region
      %982 = dma.done [#allocation4], 256
    $region64: #{tpu_custom_call.1} parent=1 // pred_fallthru
      _
    %983 = vsyncpa [#allocation3], 1
    %984 = vsyncpa [#allocation6], 1
    %985 = vsyncpa [#allocation9], 1
    %986 = vsyncpa [#allocation4], 1

</llo_original>
